<compile_context>
chip_gen: v7x
topology: tpu7x:2x2x1
jax: 0.10.0
libtpu: 0.0.40
codegen_flags: <defaults>
</compile_context>

<pallas_src>
import jax
import jax.numpy as jnp
from jax.experimental import pallas as pl
from jax.experimental.pallas import tpu as pltpu

MODES = 2  # modes1 = modes2 = 2 (module-level `modes` in the torch script)


# ----------------------------------------------------------------------------
# Weight packing (parameter-only; hoisted out of the forward pass).
# Per retained mode k the complex multiply is expanded over real/imag channels:
#   w_pack[k] = [[wr_k, wi_k],
#                [-wi_k, wr_k]]        shape (2Ci, 2Co)
# ----------------------------------------------------------------------------
def pack_spectral_weights(w1r, w1i, w2r, w2i):
    ci, co, m, _ = w1r.shape
    k = 2 * m * m
    wr = jnp.concatenate([w1r, w2r], axis=2).reshape(ci, co, k).astype(jnp.float32)
    wi = jnp.concatenate([w1i, w2i], axis=2).reshape(ci, co, k).astype(jnp.float32)
    wr_k = jnp.transpose(wr, (2, 0, 1))                          # (K, Ci, Co)
    wi_k = jnp.transpose(wi, (2, 0, 1))
    w_pack = jnp.concatenate(
        [jnp.concatenate([wr_k, wi_k], axis=2),
         jnp.concatenate([-wi_k, wr_k], axis=2)], axis=1)        # (K, 2Ci, 2Co)
    return w_pack


# ----------------------------------------------------------------------------
# Kernel 1: per-mode spectral mixing.  Grid over the K retained modes; each
# step does one real-block MXU matmul (B, 2Ci) @ (2Ci, 2Co).
# ----------------------------------------------------------------------------
def spectral_mix_kernel(x_ref, w_ref, o_ref):
    # x_ref: (B, 2Ci)   w_ref: (2Ci, 2Co)   o_ref: (B, 2Co)
    o_ref[...] = jnp.dot(x_ref[...], w_ref[...],
                         preferred_element_type=jnp.float32)


def spectral_mix(x_pack, w_pack):
    # x_pack: (K, B, 2Ci)   w_pack: (K, 2Ci, 2Co)   ->   (K, B, 2Co)
    K, B, CI2 = x_pack.shape
    CO2 = w_pack.shape[2]
    return pl.pallas_call(
        spectral_mix_kernel,
        grid=(K,),
        in_specs=[
            pl.BlockSpec((None, B, CI2), lambda k: (k, 0, 0)),
            pl.BlockSpec((None, CI2, CO2), lambda k: (k, 0, 0)),
        ],
        out_specs=pl.BlockSpec((None, B, CO2), lambda k: (k, 0, 0)),
        out_shape=jax.ShapeDtypeStruct((K, B, CO2), jnp.float32),
        compiler_params=pltpu.CompilerParams(
            dimension_semantics=("parallel",)),
    )(x_pack, w_pack)


# ----------------------------------------------------------------------------
# Kernel 2: 1x1 conv (channel matmul) + bias + residual add + PReLU.
# Grid over (batch, lane tiles of H*W); operates directly on (B, C, H*W) so no
# HBM transposes are needed around the kernel.
# ----------------------------------------------------------------------------
def conv_add_prelu_kernel(xspec_ref, pre_ref, w_ref, b_ref, alpha_ref, out_ref):
    # xspec_ref/pre_ref/out_ref: (C, TN)   w_ref: (C, C)   b_ref: (C, 1)
    conv = jnp.dot(w_ref[...], pre_ref[...],
                   preferred_element_type=jnp.float32)
    y = xspec_ref[...] + conv + b_ref[...]
    alpha = alpha_ref[0, 0]                       # PReLU, single shared alpha
    out_ref[...] = jnp.where(y >= 0, y, alpha * y).astype(out_ref.dtype)


_STREAM_VMEM_BUDGET = 24 * 1024 * 1024  # 3 streamed (C, tn) f32 arrays, x2 buffers


def _pick_lane_tile(n, c, max_tile=8192):
    """Largest multiple-of-128 divisor of n under both the hard cap and a VMEM
    budget for the three streamed (C, tn) f32 arrays (double-buffered).  Full
    extent is used when it already fits (fewer, bigger steps: no forced split
    on single-TC chips)."""
    fit = max(128, _STREAM_VMEM_BUDGET // (3 * 2 * 4 * max(c, 1)))
    cap = min(max_tile, fit)
    if n <= cap or n % 128 != 0:
        # Full-extent blocks are always legal.
        # TODO(synk): for very large, non-128-aligned B*H*W a tail-masked chunked
        # tile would be safer than one full-extent block.
        return n
    best = 128
    for t in range(256, cap + 1, 128):
        if n % t == 0:
            best = t
    return best


def conv_add_prelu(x_spec, pre, conv_w, conv_b, alpha):
    # x_spec/pre: (B, C, N)   conv_w: (C, C)   conv_b: (C, 1)   alpha: (1, 1)
    B, C, N = x_spec.shape
    tn = _pick_lane_tile(N, C)
    grid = (B, N // tn)
    return pl.pallas_call(
        conv_add_prelu_kernel,
        grid=grid,
        in_specs=[
            pl.BlockSpec((None, C, tn), lambda b, j: (b, 0, j)),
            pl.BlockSpec((None, C, tn), lambda b, j: (b, 0, j)),
            pl.BlockSpec((C, C), lambda b, j: (0, 0)),
            pl.BlockSpec((C, 1), lambda b, j: (0, 0)),
            pl.BlockSpec((1, 1), lambda b, j: (0, 0),
                         memory_space=pltpu.MemorySpace.SMEM),
        ],
        out_specs=pl.BlockSpec((None, C, tn), lambda b, j: (b, 0, j)),
        out_shape=jax.ShapeDtypeStruct((B, C, N), jnp.float32),
        compiler_params=pltpu.CompilerParams(
            dimension_semantics=("parallel", "parallel"),
            vmem_limit_bytes=32 * 1024 * 1024),
    )(x_spec, pre, conv_w, conv_b, alpha)


# ----------------------------------------------------------------------------
# Full forward pass (FFT glue in JAX, channel mixing / conv / PReLU in Pallas)
# ----------------------------------------------------------------------------
def spectral_conv2d(x, w_pack, conv_w, conv_b, alpha):
    B, C, H, W = x.shape
    m = MODES
    K = 2 * m * m

    # TODO(synk): rfft2 / irfft2 have no Pallas primitive; computed in plain JAX.
    x_ft = jnp.fft.rfft2(x)                                     # (B, C, H, W//2+1)

    # retained low-frequency modes: rows [0:m] and [H-m:H], cols [0:m]
    x_modes = jnp.concatenate(
        [x_ft[:, :, :m, :m], x_ft[:, :, H - m:, :m]], axis=2)   # (B, C, 2m, m)
    xr = jnp.real(x_modes).reshape(B, C, K).astype(jnp.float32)
    xi = jnp.imag(x_modes).reshape(B, C, K).astype(jnp.float32)

    # per-mode real-block activations: (K, B, 2C), row = [real(c...), imag(c...)]
    x_pack = jnp.transpose(jnp.concatenate([xr, xi], axis=1), (2, 0, 1))

    out_kbc = spectral_mix(x_pack, w_pack)                      # (K, B, 2C)
    out_r = jnp.transpose(out_kbc[:, :, :C], (1, 2, 0)).reshape(B, C, 2 * m, m)
    out_i = jnp.transpose(out_kbc[:, :, C:], (1, 2, 0)).reshape(B, C, 2 * m, m)
    out_modes = (out_r + 1j * out_i).astype(jnp.complex64)

    out_ft = jnp.zeros((B, C, H, W // 2 + 1), jnp.complex64)
    out_ft = out_ft.at[:, :, :m, :m].set(out_modes[:, :, :m, :])
    out_ft = out_ft.at[:, :, H - m:, :m].set(out_modes[:, :, m:, :])

    x_spec = jnp.fft.irfft2(out_ft, s=(H, W)).astype(jnp.float32)  # (B, C, H, W)

    # contiguous reshapes only (no transposes): (B, C, H, W) -> (B, C, H*W)
    y = conv_add_prelu(x_spec.reshape(B, C, H * W),
                       x.reshape(B, C, H * W),
                       conv_w,
                       conv_b.reshape(C, 1),
                       jnp.reshape(alpha, (1, 1)))
    return y.reshape(B, C, H, W)


# ----------------------------------------------------------------------------
# Pure-JAX reference (mirrors the torch forward) for verification
# ----------------------------------------------------------------------------
def reference(x, w1r, w1i, w2r, w2i, conv_w, conv_b, alpha):
    B, C, H, W = x.shape
    m = MODES
    w1 = w1r + 1j * w1i
    w2 = w2r + 1j * w2i
    x_ft = jnp.fft.rfft2(x)
    out_ft = jnp.zeros((B, C, H, W // 2 + 1), jnp.complex64)
    out_ft = out_ft.at[:, :, :m, :m].set(
        jnp.einsum('bixy,ioxy->boxy', x_ft[:, :, :m, :m], w1))
    out_ft = out_ft.at[:, :, H - m:, :m].set(
        jnp.einsum('bixy,ioxy->boxy', x_ft[:, :, H - m:, :m], w2))
    xs = jnp.fft.irfft2(out_ft, s=(H, W))
    pre = jnp.einsum('oi,bihw->bohw', conv_w, x) + conv_b[None, :, None, None]
    y = xs + pre
    return jnp.where(y >= 0, y, alpha * y)


if __name__ == "__main__":
    B, C, H, W = 2, 4, 16, 16          # batch=2, channels=4, spatial=16
    in_ch = out_ch = C

    key = jax.random.PRNGKey(0)
    k = jax.random.split(key, 8)
    x = jax.random.normal(k[0], (B, C, H, W), jnp.float32)

    scale = 1.0 / (in_ch * out_ch)
    w1r = scale * jax.random.uniform(k[1], (in_ch, out_ch, MODES, MODES), jnp.float32)
    w1i = scale * jax.random.uniform(k[2], (in_ch, out_ch, MODES, MODES), jnp.float32)
    w2r = scale * jax.random.uniform(k[3], (in_ch, out_ch, MODES, MODES), jnp.float32)
    w2i = scale * jax.random.uniform(k[4], (in_ch, out_ch, MODES, MODES), jnp.float32)

    # nn.Conv2d(width, width, 1): weight (C, C, 1, 1) -> (C, C), plus bias (C,)
    bound = 1.0 / (in_ch ** 0.5)
    conv_w = jax.random.uniform(k[5], (C, C), jnp.float32, -bound, bound)
    conv_b = jax.random.uniform(k[6], (C,), jnp.float32, -bound, bound)

    alpha = jnp.float32(0.25)          # nn.PReLU() default init

    # parameter-only packing, done once (hoisted out of the forward pass)
    w_pack = jax.block_until_ready(pack_spectral_weights(w1r, w1i, w2r, w2i))

    out = spectral_conv2d(x, w_pack, conv_w, conv_b, alpha)
    out = jax.block_until_ready(out)

    ref = jax.block_until_ready(
        reference(x, w1r, w1i, w2r, w2i, conv_w, conv_b, alpha))

    assert out.shape == (B, C, H, W)
    assert jnp.allclose(out, ref, atol=1e-4, rtol=1e-4), \
        f"max err {jnp.max(jnp.abs(out - ref))}"
    print("KERNEL_OK")
</pallas_src>

<mosaic_0001>
module attributes {stable_mosaic.version = 11 : i64} {
  func.func @spectral_mix_kernel(%arg0: i32, %arg1: memref<1x2x8xf32, #tpu.memory_space<vmem>>, %arg2: memref<1x8x8xf32, #tpu.memory_space<vmem>>, %arg3: memref<1x2x8xf32, #tpu.memory_space<vmem>>) attributes {dimension_semantics = [#tpu.dimension_semantics<parallel>], iteration_bounds = array<i64: 8>, scalar_prefetch = 0 : i64, scratch_operands = 0 : i64, tpu.core_type = #tpu.core_type<tc>, window_params = [{transform_indices = @transform_0, window_bounds = array<i64: 1, 2, 8>}, {transform_indices = @transform_1, window_bounds = array<i64: 1, 8, 8>}, {transform_indices = @transform_2, window_bounds = array<i64: 1, 2, 8>}]} {
    %c0 = arith.constant 0 : index
    %c0_0 = arith.constant 0 : index
    %c0_1 = arith.constant 0 : index
    %0 = vector.load %arg1[%c0, %c0_0, %c0_1] : memref<1x2x8xf32, #tpu.memory_space<vmem>>, vector<1x2x8xf32>
    %1 = vector.shape_cast %0 : vector<1x2x8xf32> to vector<2x8xf32>
    %c0_2 = arith.constant 0 : index
    %c0_3 = arith.constant 0 : index
    %c0_4 = arith.constant 0 : index
    %2 = vector.load %arg2[%c0_2, %c0_3, %c0_4] : memref<1x8x8xf32, #tpu.memory_space<vmem>>, vector<1x8x8xf32>
    %3 = vector.shape_cast %2 : vector<1x8x8xf32> to vector<8x8xf32>
    %cst = arith.constant dense<0.000000e+00> : vector<2x8xf32>
    %4 = tpu.matmul %1, %3, %cst {dimension_numbers = #tpu.dot_dimension_numbers<[1], [0], [0], [1], [0, 0, 1, 1], [], []>} : vector<2x8xf32>, vector<8x8xf32>, vector<2x8xf32> -> vector<2x8xf32>
    %c0_5 = arith.constant 0 : index
    %c0_6 = arith.constant 0 : index
    %c0_7 = arith.constant 0 : index
    %5 = vector.load %arg3[%c0_5, %c0_6, %c0_7] : memref<1x2x8xf32, #tpu.memory_space<vmem>>, vector<1x2x8xf32>
    %6 = vector.shape_cast %5 : vector<1x2x8xf32> to vector<2x8xf32>
    %7 = vector.shape_cast %4 : vector<2x8xf32> to vector<1x2x8xf32>
    tpu.vector_store %arg3[%c0_5, %c0_6, %c0_7], %7 {strides = array<i32>} : memref<1x2x8xf32, #tpu.memory_space<vmem>>, vector<1x2x8xf32>,
    return
  }
  func.func @transform_0(%arg0: i32) -> (i32, i32, i32) {
    %c0_i32 = arith.constant 0 : i32
    %c0_i32_0 = arith.constant 0 : i32
    %c0_i32_1 = arith.constant 0 : i32
    return %arg0, %c0_i32, %c0_i32_0 : i32, i32, i32
  }
  func.func @transform_1(%arg0: i32) -> (i32, i32, i32) {
    %c0_i32 = arith.constant 0 : i32
    %c0_i32_0 = arith.constant 0 : i32
    %c0_i32_1 = arith.constant 0 : i32
    return %arg0, %c0_i32, %c0_i32_0 : i32, i32, i32
  }
  func.func @transform_2(%arg0: i32) -> (i32, i32, i32) {
    %c0_i32 = arith.constant 0 : i32
    %c0_i32_0 = arith.constant 0 : i32
    %c0_i32_1 = arith.constant 0 : i32
    return %arg0, %c0_i32, %c0_i32_0 : i32, i32, i32
  }
}

</mosaic_0001>

<llo_original>
// kernel: tpu_custom_call.1
$region0: #{tpu_custom_call.1}
  #allocation0 [shape = 'u32[]', space=smem, size = 0x4, offset = 0x4, fixed_abs, tag = 'smem constant byte address 0x4 - core index']
  #allocation1 [shape = 'u32[144,128]{1,0:T(1,128)}', space=vmem, size = 0x12000, scoped, tag = 'internal scratch']
  %s0 = inlined_call_operand.hbm [shape: f32[8,2,8], index: 0, kind: input, shape index: {}]
  %s1 = inlined_call_operand.hbm [shape: f32[8,8,8], index: 1, kind: input, shape index: {}]
  %s2 = inlined_call_operand.hbm [shape: f32[8,2,8], index: 2, kind: output, shape index: {}]
  %s3 = sld [smem:[#allocation0]]
  $region49: #{tpu_custom_call.1} parent=0
    _
  %s5 = ssub.s32 1, %s3
  %s6 = scalar_select 0, %s5, %s3
  $region1: #{tpu_custom_call.1} parent=0
    #allocation2 [shape = 'u8[2048]{0}', space=vmem, size = 0x800, scoped, tag = 'input window, operand 0']
    #allocation3 [shape = 's32[2]{0}', space=sflag, size = 0x8, scoped, tag = 'scoped memory for tpu_custom_call.1']
    #allocation4 [shape = 's32[2]{0}', space=sflag, size = 0x8, scoped, tag = 'scoped memory for tpu_custom_call.1']
    #allocation5 [shape = 'u8[8192]{0}', space=vmem, size = 0x2000, scoped, tag = 'input window, operand 1']
    #allocation6 [shape = 's32[2]{0}', space=sflag, size = 0x8, scoped, tag = 'scoped memory for tpu_custom_call.1']
    #allocation7 [shape = 'u8[2048]{0}', space=vmem, size = 0x800, scoped, tag = 'output window, operand 0']
    %7 = vsyncpa [#allocation3], 0
    %s8 = scalar_lea.sflag [#allocation3], 1
    %9 = vsyncpa %s8, 0
    %10 = vsyncpa [#allocation6], 0
    %s11 = scalar_lea.sflag [#allocation6], 1
    %12 = vsyncpa %s11, 0
    %13 = vsyncpa [#allocation4], 0
    %s14 = scalar_lea.sflag [#allocation4], 1
    %15 = vsyncpa %s14, 0
    loop: start=0, step=1, limit=10
    $region2: #{tpu_custom_call.1} parent=1 // loop_pre_header
      _
    $region3: #{tpu_custom_call.1} parent=1 // loop_header
      %s17 = sphi 0, %s21
      %p18 = scmp.ge.s32.totalorder %s17, 10
      %s27 = sphi 0, %s29
      %s30 = sphi 0, %s27
      %s31 = sphi 0, %s30
      %s47 = sphi 0, %s31
      %s53 = sphi 0, %s55
      %s56 = sphi 0, %s53
      %s57 = sphi 0, %s56
      %s73 = sphi 0, %s57
      %s79 = sphi 0, %s81
      %s82 = sphi 0, %s79
      %s83 = sphi 0, %s82
      %s99 = sphi 0, %s83
    $region4: #{tpu_custom_call.1} parent=1 // loop_header_branch
      %20 = sbr.rel (%p18) target = $region8
    $region5: #{tpu_custom_call.1} parent=1 // loop_body
      %s22 = ssub.s32 %s17, 1
      %s23 = ssub.s32 %s17, 2
      %s24 = sadd.s32 %s17, 1
      %s25 = ssub.s32 %s17, %s24
      %p26 = scmp.eq.s32.totalorder %s25, 0
      %s28 = sadd.s32 %s27, 1
      %s29 = scalar_select %p26, %s27, %s28
      %p32 = pneg %p26
      %p33 = scmp.eq.s32.totalorder %s17, 7
      %p34 = por %p32, %p33
      %p35 = scmp.ne.s32.totalorder %s27, %s30
      %p36 = scmp.eq.s32.totalorder %s17, 0
      %p37 = por %p35, %p36
      %p38 = scmp.ne.s32.totalorder %s27, %s30
      %p39 = scmp.eq.s32.totalorder %s22, 7
      %p40 = por %p38, %p39
      %p41 = scmp.ne.s32.totalorder %s30, %s31
      %p42 = scmp.eq.s32.totalorder %s22, 0
      %p43 = por %p41, %p42
      %p44 = scmp.ne.s32.totalorder %s30, %s31
      %p45 = scmp.eq.s32.totalorder %s23, 7
      %p46 = por %p44, %p45
      %p48 = scmp.ne.s32.totalorder %s31, %s47
      %p49 = scmp.eq.s32.totalorder %s23, 0
      %p50 = por %p48, %p49
      %s51 = ssub.s32 %s17, %s24
      %p52 = scmp.eq.s32.totalorder %s51, 0
      %s54 = sadd.s32 %s53, 1
      %s55 = scalar_select %p52, %s53, %s54
      %p58 = pneg %p52
      %p59 = scmp.eq.s32.totalorder %s17, 7
      %p60 = por %p58, %p59
      %p61 = scmp.ne.s32.totalorder %s53, %s56
      %p62 = scmp.eq.s32.totalorder %s17, 0
      %p63 = por %p61, %p62
      %p64 = scmp.ne.s32.totalorder %s53, %s56
      %p65 = scmp.eq.s32.totalorder %s22, 7
      %p66 = por %p64, %p65
      %p67 = scmp.ne.s32.totalorder %s56, %s57
      %p68 = scmp.eq.s32.totalorder %s22, 0
      %p69 = por %p67, %p68
      %p70 = scmp.ne.s32.totalorder %s56, %s57
      %p71 = scmp.eq.s32.totalorder %s23, 7
      %p72 = por %p70, %p71
      %p74 = scmp.ne.s32.totalorder %s57, %s73
      %p75 = scmp.eq.s32.totalorder %s23, 0
      %p76 = por %p74, %p75
      %s77 = ssub.s32 %s17, %s24
      %p78 = scmp.eq.s32.totalorder %s77, 0
      %s80 = sadd.s32 %s79, 1
      %s81 = scalar_select %p78, %s79, %s80
      %p84 = pneg %p78
      %p85 = scmp.eq.s32.totalorder %s17, 7
      %p86 = por %p84, %p85
      %p87 = scmp.ne.s32.totalorder %s79, %s82
      %p88 = scmp.eq.s32.totalorder %s17, 0
      %p89 = por %p87, %p88
      %p90 = scmp.ne.s32.totalorder %s79, %s82
      %p91 = scmp.eq.s32.totalorder %s22, 7
      %p92 = por %p90, %p91
      %p93 = scmp.ne.s32.totalorder %s82, %s83
      %p94 = scmp.eq.s32.totalorder %s22, 0
      %p95 = por %p93, %p94
      %p96 = scmp.ne.s32.totalorder %s82, %s83
      %p97 = scmp.eq.s32.totalorder %s23, 7
      %p98 = por %p96, %p97
      %p100 = scmp.ne.s32.totalorder %s83, %s99
      %p101 = scmp.eq.s32.totalorder %s23, 0
      %p102 = por %p100, %p101
      %p103 = scmp.le.s32.totalorder 1, %s17
      %p104 = scmp.lt.s32.totalorder %s17, 9
      %p105 = pnand %p103, %p104
      %p106 = pneg %p105
      // Predicated region
      $region9: #{tpu_custom_call.1} parent=5 // pred_check
        _
      $region10: #{tpu_custom_call.1} parent=5 // pred_check_branch
        %108 = sbr.rel (%p105) target = $region12
      $region11: #{tpu_custom_call.1} parent=5 // pred_region
        %s109 = ssub.s32 %s17, 1
      $region12: #{tpu_custom_call.1} parent=5 // pred_fallthru
        _
      %p110 = scmp.lt.s32.totalorder %s17, 8
      // Predicated region
      $region13: #{tpu_custom_call.1} parent=5 // pred_check
        %p111 = pneg %p110
      $region14: #{tpu_custom_call.1} parent=5 // pred_check_branch
        %113 = sbr.rel (%p111) target = $region16
      $region15: #{tpu_custom_call.1} parent=5 // pred_region
        // Predicated region
        $region17: #{tpu_custom_call.1} parent=15 // pred_check
          %p114 = pneg %p37
        $region18: #{tpu_custom_call.1} parent=15 // pred_check_branch
          %116 = sbr.rel (%p114) target = $region20
        $region19: #{tpu_custom_call.1} parent=15 // pred_region
          %s117 = sand.u32 %s27, 1
          %s118 = scalar_lea.sflag [#allocation3], %s117
          %s119 = sand.u32 %s27, 1
          %s120 = smul.addr %s119, 2
          %s121 = scalar_lea.vmem [#allocation2], %s120
          %s123 = ssub.s32 32, 32
          %124 = vsyncadd %s118, %s123
          %s125 = smul.addr %s17, 32
          %s126 = scalar_lea.hbm %s0, %s125
          %s128 = sshll.u32 %s121, 4
          %s129 = int_to_ptr.vmem [resolvable:$true] %s128
          %131 = dma.hbm_to_vmem [thread:$0]  %s126, 32, %s129, %s118
        $region20: #{tpu_custom_call.1} parent=15 // pred_fallthru
          _
        // Predicated region
        $region21: #{tpu_custom_call.1} parent=15 // pred_check
          %p132 = pneg %p63
        $region22: #{tpu_custom_call.1} parent=15 // pred_check_branch
          %134 = sbr.rel (%p132) target = $region24
        $region23: #{tpu_custom_call.1} parent=15 // pred_region
          %s135 = sand.u32 %s53, 1
          %s136 = scalar_lea.sflag [#allocation6], %s135
          %s137 = sand.u32 %s53, 1
          %s138 = smul.addr %s137, 8
          %s139 = scalar_lea.vmem [#allocation5], %s138
          %s141 = ssub.s32 128, 128
          %142 = vsyncadd %s136, %s141
          %s143 = smul.addr %s17, 128
          %s144 = scalar_lea.hbm %s1, %s143
          %s146 = sshll.u32 %s139, 4
          %s147 = int_to_ptr.vmem [resolvable:$true] %s146
          %149 = dma.hbm_to_vmem [thread:$0]  %s144, 128, %s147, %s136
        $region24: #{tpu_custom_call.1} parent=15 // pred_fallthru
          _
      $region16: #{tpu_custom_call.1} parent=5 // pred_fallthru
        _
      %p150 = scmp.le.s32.totalorder 1, %s17
      %p151 = scmp.lt.s32.totalorder %s17, 9
      %p152 = pnand %p150, %p151
      %p153 = pneg %p152
      // Predicated region
      $region25: #{tpu_custom_call.1} parent=5 // pred_check
        _
      $region26: #{tpu_custom_call.1} parent=5 // pred_check_branch
        %155 = sbr.rel (%p152) target = $region28
      $region27: #{tpu_custom_call.1} parent=5 // pred_region
        %s156 = ssub.s32 %s17, 1
        %s157 = sand.u32 %s30, 1
        %s158 = scalar_lea.sflag [#allocation3], %s157
        %s159 = sand.u32 %s30, 1
        %s160 = smul.addr %s159, 2
        %s161 = scalar_lea.vmem [#allocation2], %s160
        // Predicated region
        $region29: #{tpu_custom_call.1} parent=27 // pred_check
          %p162 = pneg %p43
        $region30: #{tpu_custom_call.1} parent=27 // pred_check_branch
          %164 = sbr.rel (%p162) target = $region32
        $region31: #{tpu_custom_call.1} parent=27 // pred_region
          %165 = dma.done %s158, 32
        $region32: #{tpu_custom_call.1} parent=27 // pred_fallthru
          _
        %s166 = sand.u32 %s56, 1
        %s167 = scalar_lea.sflag [#allocation6], %s166
        %s168 = sand.u32 %s56, 1
        %s169 = smul.addr %s168, 8
        %s170 = scalar_lea.vmem [#allocation5], %s169
        // Predicated region
        $region33: #{tpu_custom_call.1} parent=27 // pred_check
          %p171 = pneg %p69
        $region34: #{tpu_custom_call.1} parent=27 // pred_check_branch
          %173 = sbr.rel (%p171) target = $region36
        $region35: #{tpu_custom_call.1} parent=27 // pred_region
          %174 = dma.done %s167, 128
        $region36: #{tpu_custom_call.1} parent=27 // pred_fallthru
          _
        %s175 = sand.u32 %s30, 1
        %s176 = scalar_lea.sflag [#allocation3], %s175
        %s177 = sand.u32 %s30, 1
        %s178 = smul.addr %s177, 2
        %s179 = scalar_lea.vmem [#allocation2], %s178
        %p180 = pneg %p43
        %p181 = pneg %p40
        %s182 = sand.u32 %s56, 1
        %s183 = scalar_lea.sflag [#allocation6], %s182
        %s184 = sand.u32 %s56, 1
        %s185 = smul.addr %s184, 8
        %s186 = scalar_lea.vmem [#allocation5], %s185
        %p187 = pneg %p69
        %p188 = pneg %p66
        %p189 = pneg %p95
        %p190 = pneg %p92
        %s191 = sand.u32 %s82, 1
        %s192 = scalar_lea.sflag [#allocation4], %s191
        %s193 = sand.u32 %s82, 1
        %s194 = smul.addr %s193, 2
        %s195 = scalar_lea.vmem [#allocation7], %s194
        %v196 = vld [vmem:[%s161] sm:$0x3]
        %v197 = vld [vmem:[%s170] sm:$0xff]
        %vm198 = vcmask 64512
        %v200 = vsel %vm198, %v196, 0
        %202 = vmatprep.subr.mxu0 0.0
        %203 = vmatpush1.msra.mxu0 %v197
        %204 = vmatprep.subr.mxu0 0.0
        %205 = vmatpush1.msra.mxu0 0.0
        %206 = vmatprep.subr.mxu0 0.0
        %207 = vmatpush1.msra.mxu0 0.0
        %208 = vmatprep.subr.mxu0 0.0
        %209 = vmatpush1.msra.mxu0 0.0
        %210 = vmatprep.subr.mxu0 0.0
        %211 = vmatpush1.msra.mxu0 0.0
        %212 = vmatprep.subr.mxu0 0.0
        %213 = vmatpush1.msra.mxu0 0.0
        %214 = vmatprep.subr.mxu0 0.0
        %215 = vmatpush1.msra.mxu0 0.0
        %216 = vmatprep.subr.mxu0 0.0
        %217 = vmatpush1.msra.mxu0 0.0
        %218 = vmatprep.subr.mxu0 0.0
        %219 = vmatpush1.msra.mxu0 0.0
        %220 = vmatprep.subr.mxu0 0.0
        %221 = vmatpush1.msra.mxu0 0.0
        %222 = vmatprep.subr.mxu0 0.0
        %223 = vmatpush1.msra.mxu0 0.0
        %224 = vmatprep.subr.mxu0 0.0
        %225 = vmatpush1.msra.mxu0 0.0
        %226 = vmatprep.subr.mxu0 0.0
        %227 = vmatpush1.msra.mxu0 0.0
        %228 = vmatprep.subr.mxu0 0.0
        %229 = vmatpush1.msra.mxu0 0.0
        %230 = vmatprep.subr.mxu0 0.0
        %231 = vmatpush1.msra.mxu0 0.0
        %232 = vmatprep.subr.mxu0 0.0
        %233 = vmatpush1.msra.mxu0 0.0
        %234 = vmatprep.subr.mxu0 0.0
        %235 = vmatpush1.msra.mxu0 0.0
        %236 = vmatprep.subr.mxu0 0.0
        %237 = vmatpush1.msra.mxu0 0.0
        %238 = vmatprep.subr.mxu0 0.0
        %239 = vmatpush1.msra.mxu0 0.0
        %240 = vmatprep.subr.mxu0 0.0
        %241 = vmatpush1.msra.mxu0 0.0
        %242 = vmatprep.subr.mxu0 0.0
        %243 = vmatpush1.msra.mxu0 0.0
        %244 = vmatprep.subr.mxu0 0.0
        %245 = vmatpush1.msra.mxu0 0.0
        %246 = vmatprep.subr.mxu0 0.0
        %247 = vmatpush1.msra.mxu0 0.0
        %248 = vmatprep.subr.mxu0 0.0
        %249 = vmatpush1.msra.mxu0 0.0
        %250 = vmatprep.subr.mxu0 0.0
        %251 = vmatpush1.msra.mxu0 0.0
        %252 = vmatprep.subr.mxu0 0.0
        %253 = vmatpush1.msra.mxu0 0.0
        %254 = vmatprep.subr.mxu0 0.0
        %255 = vmatpush1.msra.mxu0 0.0
        %256 = vmatprep.subr.mxu0 0.0
        %257 = vmatpush1.msra.mxu0 0.0
        %258 = vmatprep.subr.mxu0 0.0
        %259 = vmatpush1.msra.mxu0 0.0
        %260 = vmatprep.subr.mxu0 0.0
        %261 = vmatpush1.msra.mxu0 0.0
        %262 = vmatprep.subr.mxu0 0.0
        %263 = vmatpush1.msra.mxu0 0.0
        %264 = vmatprep.subr.mxu0 0.0
        %265 = vmatpush1.msra.mxu0 0.0
        %266 = vmatprep.mubr.f32.mxu0 0.0
        %267 = vmatmul.mubr.f32.gmra.mrb[0].mxu0 %v200
        %v268 = vpop.f32.mrb[0].mxu0
        %v269 = vadd.f32 0.0, %v268
        %v270 = vpop.f32.mrb[0].mxu0
        %271 = vdwg.mxu0
        %vm272 = vcmask 58368
        %273 = vst.msk [vmem:[%s195] sm:$0x3] %vm272, %v269
        %s274 = sand.u32 %s82, 1
        %s275 = scalar_lea.sflag [#allocation4], %s274
        %s276 = sand.u32 %s82, 1
        %s277 = smul.addr %s276, 2
        %s278 = scalar_lea.vmem [#allocation7], %s277
        // Predicated region
        $region37: #{tpu_custom_call.1} parent=27 // pred_check
          %p279 = pneg %p92
        $region38: #{tpu_custom_call.1} parent=27 // pred_check_branch
          %281 = sbr.rel (%p279) target = $region40
        $region39: #{tpu_custom_call.1} parent=27 // pred_region
          %s283 = ssub.s32 32, 32
          %284 = vsyncadd %s275, %s283
          %s285 = smul.addr %s22, 32
          %s286 = scalar_lea.hbm %s2, %s285
          %s288 = sshll.u32 %s278, 4
          %s289 = int_to_ptr.vmem [resolvable:$true] %s288
          %291 = dma.vmem_to_hbm [thread:$0]  %s289, 32, %s286, %s275
        $region40: #{tpu_custom_call.1} parent=27 // pred_fallthru
          _
      $region28: #{tpu_custom_call.1} parent=5 // pred_fallthru
        _
      %p292 = scmp.le.s32.totalorder 2, %s17
      // Predicated region
      $region41: #{tpu_custom_call.1} parent=5 // pred_check
        %p293 = pneg %p292
      $region42: #{tpu_custom_call.1} parent=5 // pred_check_branch
        %295 = sbr.rel (%p293) target = $region44
      $region43: #{tpu_custom_call.1} parent=5 // pred_region
        %s296 = ssub.s32 %s17, 2
        // Predicated region
        $region45: #{tpu_custom_call.1} parent=43 // pred_check
          %p297 = pneg %p98
        $region46: #{tpu_custom_call.1} parent=43 // pred_check_branch
          %299 = sbr.rel (%p297) target = $region48
        $region47: #{tpu_custom_call.1} parent=43 // pred_region
          %s300 = sand.u32 %s83, 1
          %s301 = scalar_lea.sflag [#allocation4], %s300
          %s302 = sand.u32 %s83, 1
          %s303 = smul.addr %s302, 2
          %s304 = scalar_lea.vmem [#allocation7], %s303
          %305 = dma.done %s301, 32
        $region48: #{tpu_custom_call.1} parent=43 // pred_fallthru
          _
      $region44: #{tpu_custom_call.1} parent=5 // pred_fallthru
        _
    $region6: #{tpu_custom_call.1} parent=1 // loop_footer
      %s21 = sadd.s32 1, %s17
    $region7: #{tpu_custom_call.1} parent=1 // loop_footer_branch
      %16 = sbr.rel target = $region3
    $region8: #{tpu_custom_call.1} parent=1 // loop_exit
      _
    %306 = vsyncpa [#allocation3], 1
    %s307 = scalar_lea.sflag [#allocation3], 1
    %308 = vsyncpa %s307, 1
    %309 = vsyncpa [#allocation6], 1
    %s310 = scalar_lea.sflag [#allocation6], 1
    %311 = vsyncpa %s310, 1
    %312 = vsyncpa [#allocation4], 1
    %s313 = scalar_lea.sflag [#allocation4], 1
    %314 = vsyncpa %s313, 1

</llo_original>
